<compile_context>
chip_gen: v6e
topology: v6e:2x2x1
jax: 0.10.0
libtpu: 0.0.40
codegen_flags: <defaults>
</compile_context>

<pallas_src>
import jax
import jax.numpy as jnp
from jax.experimental import pallas as pl
from jax.experimental.pallas import tpu as pltpu


_LANE = 128
_MAX_TILE_B = 8192                       # review: 2048-8192 cap
_TILE_VMEM_BUDGET = 4 * 1024 * 1024      # x double-buffer + elementwise temps
_HCACHE_VMEM_BUDGET = 6 * 1024 * 1024    # persistent relu(W1 x + b1) cache
# Budgets sum to well under v5e's 16 MiB scoped-VMEM default, so no
# vmem_limit_bytes override is needed on any generation (v7x physical = 64 MiB).


def _round_up(n, m):
    return ((n + m - 1) // m) * m


# ----------------------------- kernel helpers -----------------------------

def _hidden_block(x_ref, w1_ref, b1_ref):
    """relu(W1 @ x^T + b1) for one batch tile -> (H, tile_b), batch on lanes.

    x_ref is the natural-layout (tile_b, K) f32 tile; it is cast to bf16 and
    contracted K-with-K, i.e. the transpose happens at the MXU (XLU slot),
    never in HBM.
    """
    h = jax.lax.dot_general(
        w1_ref[...], x_ref[...].astype(jnp.bfloat16),
        dimension_numbers=(((1,), (1,)), ((), ())),
        preferred_element_type=jnp.float32)
    return jnp.maximum(h + b1_ref[...], 0.0)


def _fold_bn(s, ss, gamma, beta, batch_f):
    """Fold BatchNorm into a per-feature FMA: hn = h * scale + shift."""
    mean = s / batch_f
    var = jnp.maximum(ss / batch_f - mean * mean, 0.0)   # guard tiny negative
    inv_std = jax.lax.rsqrt(var + 1e-5)
    scale = gamma * inv_std
    shift = beta - mean * scale
    return scale, shift


def _project(hn, w2_ref, b2_ref):
    """(hidden -> 1) Linear + sigmoid: VPU mul + sublane reduce, lane-dense out."""
    logit = jnp.sum(hn * w2_ref[...], axis=0, keepdims=True) + b2_ref[...]
    return jax.nn.sigmoid(logit)


# ------------------------------ kernel bodies ------------------------------

def _disc_single_tile_kernel(batch_ref, x_ref, w1_ref, b1_ref, gamma_ref,
                             beta_ref, w2_ref, b2_ref, o_ref):
    """Whole (padded) batch in one tile: stats + normalize + project, one pass."""
    batch = batch_ref[0]
    tile_b = o_ref.shape[1]

    h = _hidden_block(x_ref, w1_ref, b1_ref)                      # (H, tile_b) f32

    # Mask batch padding out of the BN statistics.
    col = jax.lax.broadcasted_iota(jnp.int32, (1, tile_b), 1)
    hm = jnp.where(col < batch, h, 0.0)

    s = jnp.sum(hm, axis=1, keepdims=True)                        # (H, 1) lane reduce
    ss = jnp.sum(hm * hm, axis=1, keepdims=True)
    scale, shift = _fold_bn(s, ss, gamma_ref[...], beta_ref[...],
                            batch.astype(jnp.float32))

    o_ref[...] = _project(h * scale + shift, w2_ref, b2_ref)


def _disc_two_pass_kernel(batch_ref, x_ref, w1_ref, b1_ref, gamma_ref,
                          beta_ref, w2_ref, b2_ref, o_ref,
                          sum_ref, sumsq_ref, scale_ref, shift_ref, *h_cache):
    """grid = (2, nb). Pass 0: global BN sum/sumsq (+ optional h cache).
    Pass 1: folded-BN normalize + project.  use_cache is static (scratch count)."""
    use_cache = len(h_cache) == 1
    p = pl.program_id(0)            # 0 = stats pass, 1 = normalize + project pass
    i = pl.program_id(1)            # batch tile index
    nb = pl.num_programs(1)
    batch = batch_ref[0]
    tile_b = o_ref.shape[1]

    @pl.when(p == 0)
    def _stats_pass():
        @pl.when(i == 0)
        def _init():
            sum_ref[...] = jnp.zeros_like(sum_ref)
            sumsq_ref[...] = jnp.zeros_like(sumsq_ref)

        h = _hidden_block(x_ref, w1_ref, b1_ref)
        col = jax.lax.broadcasted_iota(jnp.int32, (1, tile_b), 1) + i * tile_b
        hm = jnp.where(col < batch, h, 0.0)                       # mask padding
        sum_ref[...] += jnp.sum(hm, axis=1, keepdims=True)
        sumsq_ref[...] += jnp.sum(hm * hm, axis=1, keepdims=True)

        if use_cache:
            h_cache[0][i] = h       # persist the tile's hidden activations (f32)

        @pl.when(i == nb - 1)
        def _finalize():
            scale, shift = _fold_bn(sum_ref[...], sumsq_ref[...],
                                    gamma_ref[...], beta_ref[...],
                                    batch.astype(jnp.float32))
            scale_ref[...] = scale
            shift_ref[...] = shift

    @pl.when(p == 1)
    def _project_pass():
        if use_cache:
            h = h_cache[0][i]       # no x read, no MXU recompute
        else:
            h = _hidden_block(x_ref, w1_ref, b1_ref)
        o_ref[...] = _project(h * scale_ref[...] + shift_ref[...], w2_ref, b2_ref)


# -------------------------------- wrapper ----------------------------------

def discriminator_forward(x, w1, b1, gamma, beta, w2, b2, *,
                          tile_b=None, use_hcache=None):
    """Forward pass of the DANN Discriminator.

    PyTorch-native parameter layouts:
      x:     (B, input_dim)            float32
      w1:    (hidden_dim, input_dim)   dis1.weight
      b1:    (hidden_dim,)             dis1.bias
      gamma: (hidden_dim,)             bn.weight
      beta:  (hidden_dim,)             bn.bias
      w2:    (1, hidden_dim)           dis2.weight
      b2:    (1,)                      dis2.bias
    Returns (B, 1) float32 sigmoid probabilities (training-mode BatchNorm).
    """
    B, K = x.shape
    H = w1.shape[0]

    if tile_b is None:
        # Per-batch-row VMEM cost of one grid step: double-buffered f32 x tile,
        # its bf16 cast, a few (H, tile_b) f32 temporaries (h / mask / hn), and
        # the double-buffered (1, tile_b) output row.
        bytes_per_row = 2 * K * 4 + K * 2 + 4 * H * 4 + 2 * 4
        t = (_TILE_VMEM_BUDGET // bytes_per_row) // _LANE * _LANE
        t = max(_LANE, min(t, _MAX_TILE_B))
        tile_b = min(t, _round_up(B, _LANE))   # whole batch in one tile when possible
    else:
        tile_b = max(_LANE, _round_up(tile_b, _LANE))

    nb = -(-B // tile_b)
    B_pad = nb * tile_b

    # Small parameters: bf16 only for the MXU operand, f32 for VPU/EUP math.
    w1_bf = w1.astype(jnp.bfloat16)                      # (H, K), VMEM-resident
    b1_c = b1.reshape(H, 1).astype(jnp.float32)
    gamma_c = gamma.reshape(H, 1).astype(jnp.float32)
    beta_c = beta.reshape(H, 1).astype(jnp.float32)
    w2_c = w2.reshape(H, 1).astype(jnp.float32)
    b2_c = b2.reshape(1, 1).astype(jnp.float32)
    batch_arr = jnp.asarray([B], dtype=jnp.int32)        # scalar-prefetch (SMEM)
    x_f32 = x.astype(jnp.float32)                        # natural layout, no copy

    if nb == 1:
        # Single grid step: one x DMA, stats + normalize + project in one body.
        const = lambda shape: pl.BlockSpec(shape, lambda i, b: (0, 0))
        out = pl.pallas_call(
            _disc_single_tile_kernel,
            out_shape=jax.ShapeDtypeStruct((1, tile_b), jnp.float32),
            grid_spec=pltpu.PrefetchScalarGridSpec(
                num_scalar_prefetch=1,
                grid=(1,),
                in_specs=[
                    pl.BlockSpec((tile_b, K), lambda i, b: (0, 0)),  # x (partial block ok)
                    const((H, K)),                                   # W1
                    const((H, 1)), const((H, 1)), const((H, 1)),     # b1, gamma, beta
                    const((H, 1)), const((1, 1)),                    # w2 column, b2
                ],
                out_specs=pl.BlockSpec((1, tile_b), lambda i, b: (0, 0)),
            ),
            compiler_params=pltpu.CompilerParams(
                dimension_semantics=("arbitrary",)),
        )(batch_arr, x_f32, w1_bf, b1_c, gamma_c, beta_c, w2_c, b2_c)
        return out[0, :B].reshape(B, 1)

    # Multi-tile: two passes, global BN stats in VMEM scratch.
    if use_hcache is None:
        use_hcache = (nb * H * tile_b * 4) <= _HCACHE_VMEM_BUDGET

    if use_hcache:
        # Pass 1 never reads x: pin its x block index so no further DMAs issue.
        x_map = lambda p, i, b: (i * (1 - p), 0)
    else:
        x_map = lambda p, i, b: (i, 0)

    const = lambda shape: pl.BlockSpec(shape, lambda p, i, b: (0, 0))
    scratch = [pltpu.VMEM((H, 1), jnp.float32) for _ in range(4)]  # sum, sumsq, scale, shift
    if use_hcache:
        scratch.append(pltpu.VMEM((nb, H, tile_b), jnp.float32))

    out = pl.pallas_call(
        _disc_two_pass_kernel,
        out_shape=jax.ShapeDtypeStruct((1, B_pad), jnp.float32),
        grid_spec=pltpu.PrefetchScalarGridSpec(
            num_scalar_prefetch=1,
            grid=(2, nb),                        # (pass, batch tile)
            in_specs=[
                pl.BlockSpec((tile_b, K), x_map),                    # x tile
                const((H, K)),                                       # W1
                const((H, 1)), const((H, 1)), const((H, 1)),         # b1, gamma, beta
                const((H, 1)), const((1, 1)),                        # w2 column, b2
            ],
            # Pass 0 writes nothing: its output block index stays pinned at 0 so
            # Pallas never writes back an untouched block (writeback only occurs
            # on block-index change, first of which happens inside pass 1).
            out_specs=pl.BlockSpec((1, tile_b), lambda p, i, b: (0, i * p)),
            scratch_shapes=scratch,
        ),
        compiler_params=pltpu.CompilerParams(
            # Global BN stats carried in scratch across both axes -> sequential.
            dimension_semantics=("arbitrary", "arbitrary")),
    )(batch_arr, x_f32, w1_bf, b1_c, gamma_c, beta_c, w2_c, b2_c)

    return out[0, :B].reshape(B, 1)


# ------------------------------- references --------------------------------

def reference_forward(x, w1, b1, gamma, beta, w2, b2):
    """Pure-JAX f32 reference (PyTorch training-mode semantics)."""
    h = jnp.maximum(x @ w1.T + b1, 0.0)
    mean = jnp.mean(h, axis=0, keepdims=True)
    var = jnp.mean((h - mean) ** 2, axis=0, keepdims=True)
    hn = (h - mean) * jax.lax.rsqrt(var + 1e-5) * gamma + beta
    return jax.nn.sigmoid(hn @ w2.T + b2)


def reference_forward_bf16_matched(x, w1, b1, gamma, beta, w2, b2):
    """Reference using the same bf16-MXU / folded-BN arithmetic as the kernel."""
    h = jnp.dot(x.astype(jnp.bfloat16), w1.astype(jnp.bfloat16).T,
                preferred_element_type=jnp.float32) + b1
    h = jnp.maximum(h, 0.0)
    mean = jnp.mean(h, axis=0, keepdims=True)
    var = jnp.mean(h * h, axis=0, keepdims=True) - mean * mean
    inv_std = jax.lax.rsqrt(var + 1e-5)
    scale = gamma * inv_std
    hn = h * scale + (beta - mean * scale)
    return jax.nn.sigmoid(hn @ w2.T + b2)


if __name__ == "__main__":
    # Small shapes consistent with the module (input_dim == hidden_dim).
    B, INPUT_DIM, HIDDEN_DIM = 8, 32, 32

    key = jax.random.PRNGKey(0)
    k_x, k_w1, k_b1, k_w2, k_b2, k_x2 = jax.random.split(key, 6)

    x = jax.random.normal(k_x, (B, INPUT_DIM), dtype=jnp.float32)
    # PyTorch-native parameter layouts.
    w1 = jax.random.normal(k_w1, (HIDDEN_DIM, INPUT_DIM), jnp.float32) * 0.1
    b1 = jax.random.normal(k_b1, (HIDDEN_DIM,), jnp.float32) * 0.1
    gamma = jnp.ones((HIDDEN_DIM,), jnp.float32)   # BatchNorm1d default init
    beta = jnp.zeros((HIDDEN_DIM,), jnp.float32)
    w2 = jax.random.normal(k_w2, (1, HIDDEN_DIM), jnp.float32) * 0.1
    b2 = jax.random.normal(k_b2, (1,), jnp.float32) * 0.1

    # 1) Default path: whole batch in one tile -> single-pass kernel.
    out = jax.block_until_ready(
        discriminator_forward(x, w1, b1, gamma, beta, w2, b2))
    ref_m = reference_forward_bf16_matched(x, w1, b1, gamma, beta, w2, b2)
    ref_f = reference_forward(x, w1, b1, gamma, beta, w2, b2)
    assert out.shape == (B, 1)
    assert jnp.allclose(out, ref_m, atol=1e-4, rtol=1e-4), \
        "single-tile: mismatch vs bf16-matched reference"
    assert jnp.allclose(out, ref_f, atol=1e-2, rtol=1e-2), \
        "single-tile: mismatch vs f32 reference"

    # 2) Multi-tile two-pass paths (forced tiny tile, ragged batch): with the
    #    persistent h-cache and with the recompute fallback.
    B2 = 300
    x2 = jax.random.normal(k_x2, (B2, INPUT_DIM), dtype=jnp.float32)
    ref2_m = reference_forward_bf16_matched(x2, w1, b1, gamma, beta, w2, b2)
    ref2_f = reference_forward(x2, w1, b1, gamma, beta, w2, b2)
    for cache in (True, False):
        out2 = jax.block_until_ready(
            discriminator_forward(x2, w1, b1, gamma, beta, w2, b2,
                                  tile_b=128, use_hcache=cache))
        assert out2.shape == (B2, 1)
        assert jnp.allclose(out2, ref2_m, atol=1e-4, rtol=1e-4), \
            f"two-pass(cache={cache}): mismatch vs bf16-matched reference"
        assert jnp.allclose(out2, ref2_f, atol=1e-2, rtol=1e-2), \
            f"two-pass(cache={cache}): mismatch vs f32 reference"

    print("KERNEL_OK")
</pallas_src>

<mosaic_0001>
module attributes {stable_mosaic.version = 11 : i64} {
  func.func @_disc_single_tile_kernel(%arg0: i32, %arg1: memref<1xi32, #tpu.memory_space<smem>>, %arg2: memref<128x32xf32, #tpu.memory_space<vmem>>, %arg3: memref<32x32xbf16, #tpu.memory_space<vmem>>, %arg4: memref<32x1xf32, #tpu.memory_space<vmem>>, %arg5: memref<32x1xf32, #tpu.memory_space<vmem>>, %arg6: memref<32x1xf32, #tpu.memory_space<vmem>>, %arg7: memref<32x1xf32, #tpu.memory_space<vmem>>, %arg8: memref<1x1xf32, #tpu.memory_space<vmem>>, %arg9: memref<1x128xf32, #tpu.memory_space<vmem>>) attributes {dimension_semantics = [#tpu.dimension_semantics<arbitrary>], iteration_bounds = array<i64: 1>, scalar_prefetch = 1 : i64, scratch_operands = 0 : i64, tpu.core_type = #tpu.core_type<tc>, window_params = [{transform_indices = @transform_0, window_bounds = array<i64: 128, 32>}, {pipeline_mode = #tpu.pipeline_mode<synchronous>, transform_indices = @transform_1, window_bounds = array<i64: 32, 32>}, {pipeline_mode = #tpu.pipeline_mode<synchronous>, transform_indices = @transform_2, window_bounds = array<i64: 32, 1>}, {pipeline_mode = #tpu.pipeline_mode<synchronous>, transform_indices = @transform_3, window_bounds = array<i64: 32, 1>}, {pipeline_mode = #tpu.pipeline_mode<synchronous>, transform_indices = @transform_4, window_bounds = array<i64: 32, 1>}, {pipeline_mode = #tpu.pipeline_mode<synchronous>, transform_indices = @transform_5, window_bounds = array<i64: 32, 1>}, {pipeline_mode = #tpu.pipeline_mode<synchronous>, transform_indices = @transform_6, window_bounds = array<i64: 1, 1>}, {pipeline_mode = #tpu.pipeline_mode<synchronous>, transform_indices = @transform_7, window_bounds = array<i64: 1, 128>}]} {
    %c0 = arith.constant 0 : index
    %0 = memref.load %arg1[%c0] : memref<1xi32, #tpu.memory_space<smem>>
    %c0_0 = arith.constant 0 : index
    %c0_1 = arith.constant 0 : index
    %1 = vector.load %arg3[%c0_0, %c0_1] : memref<32x32xbf16, #tpu.memory_space<vmem>>, vector<32x32xbf16>
    %c0_2 = arith.constant 0 : index
    %c0_3 = arith.constant 0 : index
    %2 = vector.load %arg2[%c0_2, %c0_3] : memref<128x32xf32, #tpu.memory_space<vmem>>, vector<128x32xf32>
    %3 = arith.truncf %2 : vector<128x32xf32> to vector<128x32xbf16>
    %cst = arith.constant dense<0.000000e+00> : vector<32x128xf32>
    %4 = tpu.matmul %1, %3, %cst {dimension_numbers = #tpu.dot_dimension_numbers<[1], [1], [0], [0], [0, 0, 1, 0], [], []>} : vector<32x32xbf16>, vector<128x32xbf16>, vector<32x128xf32> -> vector<32x128xf32>
    %c0_4 = arith.constant 0 : index
    %c0_5 = arith.constant 0 : index
    %5 = vector.load %arg4[%c0_4, %c0_5] : memref<32x1xf32, #tpu.memory_space<vmem>>, vector<32x1xf32>
    %6 = vector.broadcast %5 : vector<32x1xf32> to vector<32x128xf32>
    %7 = arith.addf %4, %6 : vector<32x128xf32>
    %cst_6 = arith.constant 0.000000e+00 : f32
    %8 = vector.broadcast %cst_6 : f32 to vector<32x128xf32>
    %9 = arith.maximumf %7, %8 : vector<32x128xf32>
    %10 = tpu.iota {dimensions = array<i32: 1>} : vector<1x128xi32>
    %11 = vector.broadcast %0 : i32 to vector<1x128xi32>
    %12 = arith.cmpi slt, %10, %11 : vector<1x128xi32>
    %cst_7 = arith.constant 0.000000e+00 : f32
    %13 = vector.shape_cast %12 : vector<1x128xi1> to vector<1x128xi1>
    %14 = vector.broadcast %13 : vector<1x128xi1> to vector<32x128xi1>
    %15 = vector.broadcast %cst_7 : f32 to vector<32x128xf32>
    %16 = arith.select %14, %9, %15 : vector<32x128xi1>, vector<32x128xf32>
    %cst_8 = arith.constant dense<0.000000e+00> : vector<32xf32>
    %17 = vector.multi_reduction <add>, %16, %cst_8 [1] : vector<32x128xf32> to vector<32xf32>
    %18 = vector.shape_cast %17 : vector<32xf32> to vector<32x1xf32>
    %19 = arith.mulf %16, %16 : vector<32x128xf32>
    %cst_9 = arith.constant dense<0.000000e+00> : vector<32xf32>
    %20 = vector.multi_reduction <add>, %19, %cst_9 [1] : vector<32x128xf32> to vector<32xf32>
    %21 = vector.shape_cast %20 : vector<32xf32> to vector<32x1xf32>
    %c0_10 = arith.constant 0 : index
    %c0_11 = arith.constant 0 : index
    %22 = vector.load %arg5[%c0_10, %c0_11] : memref<32x1xf32, #tpu.memory_space<vmem>>, vector<32x1xf32>
    %c0_12 = arith.constant 0 : index
    %c0_13 = arith.constant 0 : index
    %23 = vector.load %arg6[%c0_12, %c0_13] : memref<32x1xf32, #tpu.memory_space<vmem>>, vector<32x1xf32>
    %24 = arith.sitofp %0 : i32 to f32
    %25 = vector.broadcast %24 : f32 to vector<32x1xf32>
    %26 = arith.divf %18, %25 : vector<32x1xf32>
    %27 = vector.broadcast %24 : f32 to vector<32x1xf32>
    %28 = arith.divf %21, %27 : vector<32x1xf32>
    %29 = arith.mulf %26, %26 : vector<32x1xf32>
    %30 = arith.subf %28, %29 : vector<32x1xf32>
    %cst_14 = arith.constant 0.000000e+00 : f32
    %31 = vector.broadcast %cst_14 : f32 to vector<32x1xf32>
    %32 = arith.maximumf %30, %31 : vector<32x1xf32>
    %cst_15 = arith.constant 9.99999974E-6 : f32
    %33 = vector.broadcast %cst_15 : f32 to vector<32x1xf32>
    %34 = arith.addf %32, %33 : vector<32x1xf32>
    %35 = math.rsqrt %34 : vector<32x1xf32>
    %36 = arith.mulf %22, %35 : vector<32x1xf32>
    %37 = arith.mulf %26, %36 : vector<32x1xf32>
    %38 = arith.subf %23, %37 : vector<32x1xf32>
    %39 = vector.broadcast %36 : vector<32x1xf32> to vector<32x128xf32>
    %40 = arith.mulf %9, %39 : vector<32x128xf32>
    %41 = vector.broadcast %38 : vector<32x1xf32> to vector<32x128xf32>
    %42 = arith.addf %40, %41 : vector<32x128xf32>
    %c0_16 = arith.constant 0 : index
    %c0_17 = arith.constant 0 : index
    %43 = vector.load %arg7[%c0_16, %c0_17] : memref<32x1xf32, #tpu.memory_space<vmem>>, vector<32x1xf32>
    %44 = vector.broadcast %43 : vector<32x1xf32> to vector<32x128xf32>
    %45 = arith.mulf %42, %44 : vector<32x128xf32>
    %cst_18 = arith.constant dense<0.000000e+00> : vector<128xf32>
    %46 = vector.multi_reduction <add>, %45, %cst_18 [0] : vector<32x128xf32> to vector<128xf32>
    %47 = vector.shape_cast %46 : vector<128xf32> to vector<1x128xf32>
    %c0_19 = arith.constant 0 : index
    %c0_20 = arith.constant 0 : index
    %48 = vector.load %arg8[%c0_19, %c0_20] : memref<1x1xf32, #tpu.memory_space<vmem>>, vector<1x1xf32>
    %49 = vector.broadcast %48 : vector<1x1xf32> to vector<1x128xf32>
    %50 = arith.addf %47, %49 : vector<1x128xf32>
    %51 = arith.negf %50 : vector<1x128xf32>
    %52 = math.exp %51 : vector<1x128xf32>
    %cst_21 = arith.constant 1.000000e+00 : f32
    %53 = vector.broadcast %cst_21 : f32 to vector<1x128xf32>
    %54 = arith.addf %53, %52 : vector<1x128xf32>
    %55 = arith.divf %53, %54 : vector<1x128xf32>
    %c0_22 = arith.constant 0 : index
    %c0_23 = arith.constant 0 : index
    %56 = vector.load %arg9[%c0_22, %c0_23] : memref<1x128xf32, #tpu.memory_space<vmem>>, vector<1x128xf32>
    tpu.vector_store %arg9[%c0_22, %c0_23], %55 {strides = array<i32>} : memref<1x128xf32, #tpu.memory_space<vmem>>, vector<1x128xf32>,
    return
  }
  func.func @transform_0(%arg0: i32, %arg1: memref<1xi32, #tpu.memory_space<smem>>) -> (i32, i32) {
    %c0_i32 = arith.constant 0 : i32
    %c0_i32_0 = arith.constant 0 : i32
    %c0_i32_1 = arith.constant 0 : i32
    return %c0_i32, %c0_i32_0 : i32, i32
  }
  func.func @transform_1(%arg0: i32, %arg1: memref<1xi32, #tpu.memory_space<smem>>) -> (i32, i32) {
    %c0_i32 = arith.constant 0 : i32
    %c0_i32_0 = arith.constant 0 : i32
    %c0_i32_1 = arith.constant 0 : i32
    return %c0_i32, %c0_i32_0 : i32, i32
  }
  func.func @transform_2(%arg0: i32, %arg1: memref<1xi32, #tpu.memory_space<smem>>) -> (i32, i32) {
    %c0_i32 = arith.constant 0 : i32
    %c0_i32_0 = arith.constant 0 : i32
    %c0_i32_1 = arith.constant 0 : i32
    return %c0_i32, %c0_i32_0 : i32, i32
  }
  func.func @transform_3(%arg0: i32, %arg1: memref<1xi32, #tpu.memory_space<smem>>) -> (i32, i32) {
    %c0_i32 = arith.constant 0 : i32
    %c0_i32_0 = arith.constant 0 : i32
    %c0_i32_1 = arith.constant 0 : i32
    return %c0_i32, %c0_i32_0 : i32, i32
  }
  func.func @transform_4(%arg0: i32, %arg1: memref<1xi32, #tpu.memory_space<smem>>) -> (i32, i32) {
    %c0_i32 = arith.constant 0 : i32
    %c0_i32_0 = arith.constant 0 : i32
    %c0_i32_1 = arith.constant 0 : i32
    return %c0_i32, %c0_i32_0 : i32, i32
  }
  func.func @transform_5(%arg0: i32, %arg1: memref<1xi32, #tpu.memory_space<smem>>) -> (i32, i32) {
    %c0_i32 = arith.constant 0 : i32
    %c0_i32_0 = arith.constant 0 : i32
    %c0_i32_1 = arith.constant 0 : i32
    return %c0_i32, %c0_i32_0 : i32, i32
  }
  func.func @transform_6(%arg0: i32, %arg1: memref<1xi32, #tpu.memory_space<smem>>) -> (i32, i32) {
    %c0_i32 = arith.constant 0 : i32
    %c0_i32_0 = arith.constant 0 : i32
    %c0_i32_1 = arith.constant 0 : i32
    return %c0_i32, %c0_i32_0 : i32, i32
  }
  func.func @transform_7(%arg0: i32, %arg1: memref<1xi32, #tpu.memory_space<smem>>) -> (i32, i32) {
    %c0_i32 = arith.constant 0 : i32
    %c0_i32_0 = arith.constant 0 : i32
    %c0_i32_1 = arith.constant 0 : i32
    return %c0_i32, %c0_i32_0 : i32, i32
  }
}

</mosaic_0001>

<llo_original>
// kernel: tpu_custom_call.1
$region0: #{tpu_custom_call.1}
  #allocation0 [shape = 'u32[]', space=smem, size = 0x4, offset = 0x4, fixed_abs, tag = 'smem constant byte address 0x4 - core index']
  #allocation1 [shape = 'u32[144,128]{1,0:T(1,128)}', space=vmem, size = 0x12000, scoped, tag = 'internal scratch']
  #allocation2 [shape = 's32[1]{0}', space=sflag, size = 0x4, scoped, tag = 'scoped memory for tpu_custom_call.1']
  #allocation3 [shape = 's32[1]{0:T(128)S(6)}', space=smem, size = 0x200, scoped, tag = 'prefetched SMEM operand 0']
  #allocation4 [shape = 'f32[1,1]{1,0:T(1,128)S(1)}', space=vmem, size = 0x200, scoped, tag = 'scoped memory for tpu_custom_call.1']
  %s0 = inlined_call_operand.<no memory space> [shape: s32[1], index: 0, kind: input, shape index: {}]
  %s1 = inlined_call_operand.vmem [shape: f32[8,32], index: 1, kind: input, shape index: {}]
  %s2 = inlined_call_operand.vmem [shape: bf16[32,32], index: 2, kind: input, shape index: {}]
  %s3 = inlined_call_operand.vmem [shape: f32[32,1], index: 3, kind: input, shape index: {}]
  %s4 = inlined_call_operand.vmem [shape: f32[32,1], index: 4, kind: input, shape index: {}]
  %s5 = inlined_call_operand.vmem [shape: f32[32,1], index: 5, kind: input, shape index: {}]
  %s6 = inlined_call_operand.vmem [shape: f32[32,1], index: 6, kind: input, shape index: {}]
  %s7 = inlined_call_operand.<no memory space> [shape: f32[1,1], index: 7, kind: input, shape index: {}]
  %s8 = inlined_call_operand.hbm [shape: f32[1,128], index: 8, kind: output, shape index: {}]
  %s9 = sld [smem:[#allocation0]]
  $region38: #{tpu_custom_call.1} parent=0
    _
  %s11 = ssub.s32 1, %s9
  %s12 = scalar_select 0, %s11, %s9
  %13 = sst [smem:[#allocation3]] %s0
  %v14 = vstv %s7
  %15 = vst [vmem:[#allocation4] sm:$0x1] %v14
  $region1: #{tpu_custom_call.1} parent=0
    #allocation5 [shape = 'u8[512]{0}', space=vmem, size = 0x400, scoped, tag = 'output window, operand 0, single buffered']
    #allocation6 [shape = 's32[1]{0}', space=sflag, size = 0x4, scoped, tag = 'scoped memory for tpu_custom_call.1']
    %16 = vsyncpa [#allocation6], 0
    // Predicated region
    $region2: #{tpu_custom_call.1} parent=1 // pred_check
      _
    $region3: #{tpu_custom_call.1} parent=1 // pred_check_branch
      %18 = sbr.rel (0) target = $region5
    $region4: #{tpu_custom_call.1} parent=1 // pred_region
      _
    $region5: #{tpu_custom_call.1} parent=1 // pred_fallthru
      _
    // Predicated region
    $region6: #{tpu_custom_call.1} parent=1 // pred_check
      _
    $region7: #{tpu_custom_call.1} parent=1 // pred_check_branch
      %20 = sbr.rel (0) target = $region9
    $region8: #{tpu_custom_call.1} parent=1 // pred_region
      _
    $region9: #{tpu_custom_call.1} parent=1 // pred_fallthru
      _
    // Predicated region
    $region10: #{tpu_custom_call.1} parent=1 // pred_check
      _
    $region11: #{tpu_custom_call.1} parent=1 // pred_check_branch
      %22 = sbr.rel (0) target = $region13
    $region12: #{tpu_custom_call.1} parent=1 // pred_region
      _
    $region13: #{tpu_custom_call.1} parent=1 // pred_fallthru
      _
    // Predicated region
    $region14: #{tpu_custom_call.1} parent=1 // pred_check
      _
    $region15: #{tpu_custom_call.1} parent=1 // pred_check_branch
      %24 = sbr.rel (0) target = $region17
    $region16: #{tpu_custom_call.1} parent=1 // pred_region
      _
    $region17: #{tpu_custom_call.1} parent=1 // pred_fallthru
      _
    // Predicated region
    $region18: #{tpu_custom_call.1} parent=1 // pred_check
      _
    $region19: #{tpu_custom_call.1} parent=1 // pred_check_branch
      %26 = sbr.rel (0) target = $region21
    $region20: #{tpu_custom_call.1} parent=1 // pred_region
      _
    $region21: #{tpu_custom_call.1} parent=1 // pred_fallthru
      _
    // Predicated region
    $region22: #{tpu_custom_call.1} parent=1 // pred_check
      _
    $region23: #{tpu_custom_call.1} parent=1 // pred_check_branch
      %28 = sbr.rel (0) target = $region25
    $region24: #{tpu_custom_call.1} parent=1 // pred_region
      _
    $region25: #{tpu_custom_call.1} parent=1 // pred_fallthru
      _
    // Predicated region
    $region26: #{tpu_custom_call.1} parent=1 // pred_check
      _
    $region27: #{tpu_custom_call.1} parent=1 // pred_check_branch
      %30 = sbr.rel (0) target = $region29
    $region28: #{tpu_custom_call.1} parent=1 // pred_region
      _
    $region29: #{tpu_custom_call.1} parent=1 // pred_fallthru
      _
    %s32 = sld [smem:[#allocation3]]
    %v33 = vld [vmem:[%s2] sm:$0xf]
    %v34 = vld [vmem:[%s2 + $0x4] sm:$0xf]
    %v35 = vld [vmem:[%s2 + $0x8] sm:$0xf]
    %v36 = vld [vmem:[%s2 + $0xc] sm:$0xf]
    %v37 = vld [vmem:[%s1] sm:$0xff]
    %v38 = vld [vmem:[%s1 + $0x8] sm:$0xff]
    %v39 = vld [vmem:[%s1 + $0x10] sm:$0xff]
    %v40 = vld [vmem:[%s1 + $0x18] sm:$0xff]
    %v41 = vld [vmem:[%s1 + $0x20] sm:$0xff]
    %v42 = vld [vmem:[%s1 + $0x28] sm:$0xff]
    %v43 = vld [vmem:[%s1 + $0x30] sm:$0xff]
    %v44 = vld [vmem:[%s1 + $0x38] sm:$0xff]
    %v45 = vld [vmem:[%s1 + $0x40] sm:$0xff]
    %v46 = vld [vmem:[%s1 + $0x48] sm:$0xff]
    %v47 = vld [vmem:[%s1 + $0x50] sm:$0xff]
    %v48 = vld [vmem:[%s1 + $0x58] sm:$0xff]
    %v49 = vld [vmem:[%s1 + $0x60] sm:$0xff]
    %v50 = vld [vmem:[%s1 + $0x68] sm:$0xff]
    %v51 = vld [vmem:[%s1 + $0x70] sm:$0xff]
    %v52 = vld [vmem:[%s1 + $0x78] sm:$0xff]
    %v53 = vpack.c.bf16 %v38, %v37
    %v54 = vpack.c.bf16 %v40, %v39
    %v55 = vpack.c.bf16 %v42, %v41
    %v56 = vpack.c.bf16 %v44, %v43
    %v57 = vpack.c.bf16 %v46, %v45
    %v58 = vpack.c.bf16 %v48, %v47
    %v59 = vpack.c.bf16 %v50, %v49
    %v60 = vpack.c.bf16 %v52, %v51
    %v61 = vld [vmem:[%s3] sm:$0xff]
    %v62 = vld [vmem:[%s3 + $0x8] sm:$0xff]
    %v63 = vld [vmem:[%s3 + $0x10] sm:$0xff]
    %v64 = vld [vmem:[%s3 + $0x18] sm:$0xff]
    %66 = vset.pattern.permute.xlu0 0
    %67 = vperm.xlu0 %66, %v61
    %v68 = vpop.permute.xlu0 %67
    %71 = vset.pattern.permute.xlu0 0
    %72 = vperm.xlu0 %71, %v62
    %v73 = vpop.permute.xlu0 %72
    %76 = vset.pattern.permute.xlu0 0
    %77 = vperm.xlu0 %76, %v63
    %v78 = vpop.permute.xlu0 %77
    %81 = vset.pattern.permute.xlu0 0
    %82 = vperm.xlu0 %81, %v64
    %v83 = vpop.permute.xlu0 %82
    %v89 = vunpack.c.l.b16 %v33
    %v90 = vunpack.c.l.b16 %v34
    %v91 = vunpack.c.l.b16 %v35
    %v92 = vunpack.c.l.b16 %v36
    %v93 = vpack.c.b16 %v90, %v89
    %v94 = vpack.c.b16 %v92, %v91
    %vm95 = vcmask 261120
    %v97 = vsel %vm95, %v93, 0
    %v100 = vsel %vm95, %v94, 0
    %v103 = vsel %vm95, %v53, 0
    %v106 = vsel %vm95, %v54, 0
    %v109 = vsel %vm95, %v55, 0
    %v112 = vsel %vm95, %v56, 0
    %v115 = vsel %vm95, %v57, 0
    %v118 = vsel %vm95, %v58, 0
    %v121 = vsel %vm95, %v59, 0
    %v124 = vsel %vm95, %v60, 0
    %126 = vmatprep.subr.bf16.mxu0 0
    %127 = vmatpush1.bf16.xpose.msra.mxu0 %v124
    %128 = vmatprep.subr.bf16.mxu0 0
    %129 = vmatpush1.bf16.xpose.msra.mxu0 %v121
    %130 = vmatprep.subr.bf16.mxu0 0
    %131 = vmatpush1.bf16.xpose.msra.mxu0 %v118
    %132 = vmatprep.subr.bf16.mxu0 0
    %133 = vmatpush1.bf16.xpose.msra.mxu0 %v115
    %134 = vmatprep.subr.bf16.mxu0 0
    %135 = vmatpush1.bf16.xpose.msra.mxu0 %v112
    %136 = vmatprep.subr.bf16.mxu0 0
    %137 = vmatpush1.bf16.xpose.msra.mxu0 %v109
    %138 = vmatprep.subr.bf16.mxu0 0
    %139 = vmatpush1.bf16.xpose.msra.mxu0 %v106
    %140 = vmatprep.subr.bf16.mxu0 0
    %141 = vmatpush1.bf16.xpose.msra.mxu0 %v103
    %142 = vmatprep.subr.bf16.mxu0 0
    %143 = vmatpush2.bf16.xpose.msra.mxu0 0
    %144 = vmatprep.subr.bf16.mxu0 0
    %145 = vmatpush2.bf16.xpose.msra.mxu0 0
    %146 = vmatprep.subr.bf16.mxu0 0
    %147 = vmatpush2.bf16.xpose.msra.mxu0 0
    %148 = vmatprep.subr.bf16.mxu0 0
    %149 = vmatpush2.bf16.xpose.msra.mxu0 0
    %150 = vmatprep.subr.bf16.mxu0 0
    %151 = vmatpush2.bf16.xpose.msra.mxu0 0
    %152 = vmatprep.subr.bf16.mxu0 0
    %153 = vmatpush2.bf16.xpose.msra.mxu0 0
    %154 = vmatprep.subr.bf16.mxu0 0
    %155 = vmatpush2.bf16.xpose.msra.mxu0 0
    %156 = vmatprep.subr.bf16.mxu0 0
    %157 = vmatpush2.bf16.xpose.msra.mxu0 0
    %158 = vmatprep.mubr.bf16.mxu0 0
    %159 = vmatmul.mubr.bf16.gmra.mxu0 %v97
    %v160 = vpop.f32.mrf.mxu0
    %v161 = vadd.f32 %v68, %v160
    %v162 = vpop.f32.mrf.mxu0
    %v163 = vpop.f32.mrf.mxu0
    %v164 = vadd.f32 %v73, %v163
    %v165 = vpop.f32.mrf.mxu0
    %166 = vmatprep.mubr.bf16.mxu0 0
    %167 = vmatmul.mubr.bf16.gmra.mxu0 %v100
    %v168 = vpop.f32.mrf.mxu0
    %v169 = vadd.f32 %v78, %v168
    %v170 = vpop.f32.mrf.mxu0
    %v171 = vpop.f32.mrf.mxu0
    %v172 = vadd.f32 %v83, %v171
    %v173 = vpop.f32.mrf.mxu0
    %174 = vdwg.mxu0
    %v175 = vmax.f32 %v161, 0.0
    %v176 = vmax.f32 %v164, 0.0
    %v177 = vmax.f32 %v169, 0.0
    %v178 = vmax.f32 %v172, 0.0
    %v179 = vlaneseq
    %v180 = vand.u32 %v179, 127
    %v181 = vstv %s32
    %vm182 = vcmp.lt.s32.totalorder %v180, %v181
    %v183 = vsel %vm182, 1, 0
    %vm184 = vcmp.eq.s32.totalorder %v183, 1
    %v185 = vsel %vm184, %v175, 0.0
    %v186 = vsel %vm184, %v176, 0.0
    %v187 = vsel %vm184, %v177, 0.0
    %v188 = vsel %vm184, %v178, 0.0
    %189 = vadd.xlane.f32.xlu0 %v185
    %v190 = vpop.xlane.xlu0 %189
    %191 = vadd.xlane.f32.xlu0 %v186
    %v192 = vpop.xlane.xlu0 %191
    %193 = vadd.xlane.f32.xlu0 %v187
    %v194 = vpop.xlane.xlu0 %193
    %195 = vadd.xlane.f32.xlu0 %v188
    %v196 = vpop.xlane.xlu0 %195
    %v197 = vmul.f32 %v185, %v185
    %v198 = vmul.f32 %v186, %v186
    %v199 = vmul.f32 %v187, %v187
    %v200 = vmul.f32 %v188, %v188
    %201 = vadd.xlane.f32.xlu0 %v197
    %v202 = vpop.xlane.xlu0 %201
    %203 = vadd.xlane.f32.xlu0 %v198
    %v204 = vpop.xlane.xlu0 %203
    %205 = vadd.xlane.f32.xlu0 %v199
    %v206 = vpop.xlane.xlu0 %205
    %207 = vadd.xlane.f32.xlu0 %v200
    %v208 = vpop.xlane.xlu0 %207
    %v209 = vld [vmem:[%s4] sm:$0xff]
    %v210 = vld [vmem:[%s4 + $0x8] sm:$0xff]
    %v211 = vld [vmem:[%s4 + $0x10] sm:$0xff]
    %v212 = vld [vmem:[%s4 + $0x18] sm:$0xff]
    %v213 = vld [vmem:[%s5] sm:$0xff]
    %v214 = vld [vmem:[%s5 + $0x8] sm:$0xff]
    %v215 = vld [vmem:[%s5 + $0x10] sm:$0xff]
    %v216 = vld [vmem:[%s5 + $0x18] sm:$0xff]
    %s217 = scvt.s32.f32 %s32
    %v218 = vstv %s217
    %v219 = vrcp.pop %v218
    %v220 = vmul.f32 %v190, %v219
    %v221 = vmul.f32 %v192, %v219
    %v222 = vmul.f32 %v194, %v219
    %v223 = vmul.f32 %v196, %v219
    %v224 = vmul.f32 %v202, %v219
    %v225 = vmul.f32 %v204, %v219
    %v226 = vmul.f32 %v206, %v219
    %v227 = vmul.f32 %v208, %v219
    %v228 = vmul.f32 %v220, %v220
    %v229 = vmul.f32 %v221, %v221
    %v230 = vmul.f32 %v222, %v222
    %v231 = vmul.f32 %v223, %v223
    %v232 = vsub.f32 %v224, %v228
    %v233 = vsub.f32 %v225, %v229
    %v234 = vsub.f32 %v226, %v230
    %v235 = vsub.f32 %v227, %v231
    %v236 = vmax.f32 %v232, 0.0
    %v237 = vmax.f32 %v233, 0.0
    %v238 = vmax.f32 %v234, 0.0
    %v239 = vmax.f32 %v235, 0.0
    %v240 = vadd.f32 %v236, 1e-05
    %v241 = vadd.f32 %v237, 1e-05
    %v242 = vadd.f32 %v238, 1e-05
    %v243 = vadd.f32 %v239, 1e-05
    %v244 = vrsqrt.pop %v240
    %v245 = vrsqrt.pop %v241
    %v246 = vrsqrt.pop %v242
    %v247 = vrsqrt.pop %v243
    %v248 = vmul.f32 %v209, %v244
    %v249 = vmul.f32 %v210, %v245
    %v250 = vmul.f32 %v211, %v246
    %v251 = vmul.f32 %v212, %v247
    %v252 = vmul.f32 %v220, %v248
    %v253 = vmul.f32 %v221, %v249
    %v254 = vmul.f32 %v222, %v250
    %v255 = vmul.f32 %v223, %v251
    %v256 = vsub.f32 %v213, %v252
    %v257 = vsub.f32 %v214, %v253
    %v258 = vsub.f32 %v215, %v254
    %v259 = vsub.f32 %v216, %v255
    %261 = vset.pattern.permute.xlu0 0
    %262 = vperm.xlu0 %261, %v248
    %v263 = vpop.permute.xlu0 %262
    %266 = vset.pattern.permute.xlu0 0
    %267 = vperm.xlu0 %266, %v249
    %v268 = vpop.permute.xlu0 %267
    %271 = vset.pattern.permute.xlu0 0
    %272 = vperm.xlu0 %271, %v250
    %v273 = vpop.permute.xlu0 %272
    %276 = vset.pattern.permute.xlu0 0
    %277 = vperm.xlu0 %276, %v251
    %v278 = vpop.permute.xlu0 %277
    %v280 = vmul.f32 %v175, %v263
    %v281 = vmul.f32 %v176, %v268
    %v282 = vmul.f32 %v177, %v273
    %v283 = vmul.f32 %v178, %v278
    %285 = vset.pattern.permute.xlu0 0
    %286 = vperm.xlu0 %285, %v256
    %v287 = vpop.permute.xlu0 %286
    %290 = vset.pattern.permute.xlu0 0
    %291 = vperm.xlu0 %290, %v257
    %v292 = vpop.permute.xlu0 %291
    %295 = vset.pattern.permute.xlu0 0
    %296 = vperm.xlu0 %295, %v258
    %v297 = vpop.permute.xlu0 %296
    %300 = vset.pattern.permute.xlu0 0
    %301 = vperm.xlu0 %300, %v259
    %v302 = vpop.permute.xlu0 %301
    %v304 = vadd.f32 %v280, %v287
    %v305 = vadd.f32 %v281, %v292
    %v306 = vadd.f32 %v282, %v297
    %v307 = vadd.f32 %v283, %v302
    %v308 = vld [vmem:[%s6] sm:$0xff]
    %v309 = vld [vmem:[%s6 + $0x8] sm:$0xff]
    %v310 = vld [vmem:[%s6 + $0x10] sm:$0xff]
    %v311 = vld [vmem:[%s6 + $0x18] sm:$0xff]
    %313 = vset.pattern.permute.xlu0 0
    %314 = vperm.xlu0 %313, %v308
    %v315 = vpop.permute.xlu0 %314
    %318 = vset.pattern.permute.xlu0 0
    %319 = vperm.xlu0 %318, %v309
    %v320 = vpop.permute.xlu0 %319
    %323 = vset.pattern.permute.xlu0 0
    %324 = vperm.xlu0 %323, %v310
    %v325 = vpop.permute.xlu0 %324
    %328 = vset.pattern.permute.xlu0 0
    %329 = vperm.xlu0 %328, %v311
    %v330 = vpop.permute.xlu0 %329
    %v332 = vmul.f32 %v304, %v315
    %v333 = vmul.f32 %v305, %v320
    %v334 = vmul.f32 %v306, %v325
    %v335 = vmul.f32 %v307, %v330
    %v336 = vadd.f32 %v332, %v333
    %v337 = vadd.f32 %v336, %v334
    %v338 = vadd.f32 %v337, %v335
    %v339 = vrot.slane %v338, 4
    %v340 = vadd.f32 %v338, %v339
    %v341 = vrot.slane %v340, 2
    %v342 = vadd.f32 %v340, %v341
    %v343 = vrot.slane %v342, 1
    %v344 = vadd.f32 %v342, %v343
    %v345 = vld [vmem:[#allocation4] sm:$0x1]
    %347 = vset.pattern.permute.xlu0 0
    %348 = vperm.xlu0 %347, %v345
    %v349 = vpop.permute.xlu0 %348
    %v351 = vlaneseq
    %v352 = vshrl.u32 %v351, 7
    %v353 = vsub.s32 0, %v352
    %v354 = vrot.slane %v349, %v353
    %v355 = vadd.f32 %v344, %v354
    %v356 = vxor.u32 %v355, 2147483648
    %v357 = vmul.f32 %v356, 1.442695
    %v358 = vpow.pop %v357
    %v359 = vadd.f32 %v358, 1.0
    %v360 = vrcp.pop %v359
    %v361 = vmul.f32 1.0, %v360
    %362 = vst [vmem:[#allocation5] sm:$0x1] %v361
    // Predicated region
    $region30: #{tpu_custom_call.1} parent=1 // pred_check
      _
    $region31: #{tpu_custom_call.1} parent=1 // pred_check_branch
      %364 = sbr.rel (0) target = $region33
    $region32: #{tpu_custom_call.1} parent=1 // pred_region
      %s366 = ssub.s32 16, 16
      %367 = vsyncadd [#allocation6], %s366
      %s369 = sshll.u32 [#allocation5], 4
      %s370 = int_to_ptr.vmem [resolvable:$true] %s369
      %372 = dma.vmem_to_hbm [thread:$0]  %s370, 16, %s8, [#allocation6]
    $region33: #{tpu_custom_call.1} parent=1 // pred_fallthru
      _
    // Predicated region
    $region34: #{tpu_custom_call.1} parent=1 // pred_check
      _
    $region35: #{tpu_custom_call.1} parent=1 // pred_check_branch
      %374 = sbr.rel (0) target = $region37
    $region36: #{tpu_custom_call.1} parent=1 // pred_region
      %375 = dma.done [#allocation6], 16
    $region37: #{tpu_custom_call.1} parent=1 // pred_fallthru
      _
    %376 = vsyncpa [#allocation6], 1

</llo_original>
